<compile_context>
chip_gen: v7x
topology: tpu7x:2x2x1
jax: 0.10.0
libtpu: 0.0.40
codegen_flags: <defaults>
</compile_context>

<pallas_src>
import functools

import jax
import jax.numpy as jnp
from jax import lax
from jax.experimental import pallas as pl
from jax.experimental.pallas import tpu as pltpu

_MIB = 1024 * 1024
_LANE = 128
_SUBLANE = 8


def _round_up(x, m):
    return (x + m - 1) // m * m


def _vmem_budget_bytes():
    """Per-core VMEM budget derived from the actual chip, with headroom."""
    try:
        cap = int(pltpu.get_tpu_info().vmem_capacity_bytes)
    except Exception:
        cap = 64 * _MIB          # conservative (v7x-sized) fallback
    return int(min(cap - 16 * _MIB, 100 * _MIB))


def _kernel_vmem_bytes(x_rows, c_in_p, x_el, k, c_out_p, w_el, tl, out_el,
                       fuse_taps, xk_el):
    """Rough per-step VMEM footprint (inputs/outputs are double-buffered)."""
    x_blk = x_rows * c_in_p * x_el
    w_blk = k * c_in_p * c_out_p * w_el
    b_blk = c_out_p * 4
    o_blk = tl * c_out_p * out_el
    acc = tl * c_out_p * 4
    # fused path materializes the concatenated (tl, K*C_in_p) operand; the
    # per-tap path only needs a couple of tap-sized temporaries.
    temp = tl * (k if fuse_taps else 2) * c_in_p * xk_el
    return 2 * (x_blk + w_blk + b_blk + o_blk) + acc + temp


def _tdn_kernel(x_ref, w_ref, b_ref, o_ref, acc_ref, *, context, dilate, stride,
                tl, c_in_p, windowed, fuse_taps, cast_dtype):
    # x_ref  : (rows, C_in_p)      full padded time (full path) or halo window
    # w_ref  : (K*C_in_p, C_out_p) fused, weight-normed conv weight
    # b_ref  : (1, C_out_p)        conv bias (f32)
    # o_ref  : (TL, C_out_p)       one output time tile, lane-dense store
    # acc_ref: (TL, C_out_p) f32   scratch accumulator (per-tap path only)
    if windowed:
        base = 0
    else:
        t = pl.program_id(1)
        base = pl.multiple_of(t * (tl * stride), tl * stride)

    def tap(k):
        start = base + k * dilate
        if stride == 1:
            val = x_ref[pl.ds(start, tl), :]
        else:
            # sublane-strided ref load along time; no lane-axis gathers.
            val = x_ref[pl.ds(start, tl, stride=stride), :]
        if cast_dtype is not None:
            val = val.astype(cast_dtype)   # cast AFTER slicing (unpacked reads)
        return val

    if fuse_taps:
        # Single MXU contraction over the fused (K*C_in_p) axis; the concat is
        # block-aligned because C_in_p is a multiple of 128 lanes.
        if context == 1:
            xk = tap(0)
        else:
            xk = jnp.concatenate([tap(k) for k in range(context)], axis=-1)
        acc = jnp.dot(xk, w_ref[...], preferred_element_type=jnp.float32)
    else:
        # Per-tap matmuls accumulated into an f32 VMEM scratch: avoids
        # materializing / spilling a large concatenated operand.
        acc_ref[...] = jnp.dot(tap(0), w_ref[pl.ds(0, c_in_p), :],
                               preferred_element_type=jnp.float32)
        for k in range(1, context):
            acc_ref[...] += jnp.dot(tap(k), w_ref[pl.ds(k * c_in_p, c_in_p), :],
                                    preferred_element_type=jnp.float32)
        acc = acc_ref[...]

    acc = acc + b_ref[...]                         # bias added exactly once
    # Hardtanh(min=0, max=20), fused with the lane-dense store.
    o_ref[...] = jnp.clip(acc, 0.0, 20.0).astype(o_ref.dtype)


def tdn_layer_forward(x, v, g, bias, *, context, stride, dilate, pad,
                      time_tile=256, compute_dtype=None, time_windows=None):
    """TDNLayer.forward: replicate-pad -> weight-normed Conv1d -> Hardtanh(0, 20).

    x: [B, C_in, L] (NCL).  v: [C_out, C_in, K], g: [C_out, 1, 1], bias: [C_out].
    Returns [B, C_out, L_out], matching the PyTorch module's forward.

    time_tile     output-time rows per grid step (MXU M dim), default 256.
    compute_dtype optional MXU input dtype (e.g. jnp.bfloat16); accumulation f32.
    time_windows  None = auto (halo-windowed input tiling when the full-sequence
                  input block would not fit the VMEM budget), True/False = force.
    """
    left, right = pad
    B, C_in, L = x.shape
    C_out = v.shape[0]
    K = context

    # weight_norm: w = g * v / ||v||, norm over (in_channels, kernel) per out
    # channel.  No eps, matching PyTorch (an all-zero filter yields NaN there too).
    v32 = v.astype(jnp.float32)
    norm = jnp.sqrt(jnp.sum(v32 * v32, axis=(1, 2), keepdims=True))
    w = (g.astype(jnp.float32) * v32) / norm                     # (C_out, C_in, K)

    L_pad = L + left + right
    L_out = (L_pad - dilate * (K - 1) - 1) // stride + 1
    if L_out < 1:
        raise ValueError("sequence too short for the given context/dilate/stride")

    # Channel padding to 128 lanes: lane-dense output stores and aligned concat.
    C_in_p = _round_up(C_in, _LANE)
    C_out_p = _round_up(C_out, _LANE)

    out_dtype = x.dtype
    # bf16 + stride>1: keep x unpacked in VMEM and cast taps after slicing so
    # sublane-strided reads never hit packed data.
    cast_in_kernel = (compute_dtype is not None and stride > 1
                      and jnp.dtype(compute_dtype).itemsize < 4)
    x_vmem_dtype = (jnp.dtype(x.dtype) if (compute_dtype is None or cast_in_kernel)
                    else jnp.dtype(compute_dtype))
    w_dtype = jnp.float32 if compute_dtype is None else jnp.dtype(compute_dtype)
    xk_dtype = (jnp.dtype(compute_dtype) if compute_dtype is not None
                else x_vmem_dtype)

    sub32 = min(x_vmem_dtype.itemsize, jnp.dtype(w_dtype).itemsize,
                jnp.dtype(out_dtype).itemsize) < 4
    align = 16 if sub32 else _SUBLANE
    tl = min(_round_up(time_tile, align), _round_up(L_out, align))
    n_t = pl.cdiv(L_out, tl)
    l_out_p = n_t * tl

    # Fused single-matmul path only while the concatenated operand comfortably
    # fits ~half the vreg file; otherwise per-tap accumulate.
    fuse_taps = (K == 1) or (tl * K * C_in_p * xk_dtype.itemsize <= 128 * 1024)

    # Input rows needed by the two tiling schemes.
    rows_full = _round_up(max(L_pad, (l_out_p - 1) * stride + dilate * (K - 1) + 1),
                          _SUBLANE)
    win_p = _round_up((tl - 1) * stride + dilate * (K - 1) + 1, _SUBLANE)
    rows_win = (n_t - 1) * (tl * stride) + win_p

    budget = _vmem_budget_bytes()
    x_el = x_vmem_dtype.itemsize
    w_el = jnp.dtype(w_dtype).itemsize
    out_el = jnp.dtype(out_dtype).itemsize
    need_full = _kernel_vmem_bytes(rows_full, C_in_p, x_el, K, C_out_p, w_el,
                                   tl, out_el, fuse_taps, xk_dtype.itemsize)
    need_win = _kernel_vmem_bytes(win_p, C_in_p, x_el, K, C_out_p, w_el,
                                  tl, out_el, fuse_taps, xk_dtype.itemsize)
    if time_windows is None:
        use_windows = need_full + 2 * _MIB > budget   # full-seq block too big (v7x)
    else:
        use_windows = bool(time_windows)
    need = need_win if use_windows else need_full
    vmem_limit = int(min(budget, max(need + 4 * _MIB, 32 * _MIB)))

    # ---- operands (channels-last) -------------------------------------------
    x_cl = jnp.transpose(x, (0, 2, 1))                            # (B, L, C_in)
    if compute_dtype is not None and not cast_in_kernel:
        x_cl = x_cl.astype(compute_dtype)
    rows_needed = rows_win if use_windows else rows_full
    extra_tail = max(0, rows_needed - L_pad)
    # Replicate padding (module semantics) + tail rows that only feed trimmed
    # output positions, done in a single edge pad.
    x_cl = jnp.pad(x_cl, ((0, 0), (left, right + extra_tail), (0, 0)), mode="edge")
    if C_in_p > C_in:
        x_cl = jnp.pad(x_cl, ((0, 0), (0, 0), (0, C_in_p - C_in)))

    if use_windows:
        # Halo-windowed time tiling: each grid step only sees the (win_p, C_in_p)
        # window it needs, keeping the x block O(TL) instead of O(L).
        t_idx = (jnp.arange(n_t)[:, None] * (tl * stride)
                 + jnp.arange(win_p)[None, :])                    # (n_t, win_p)
        x_op = x_cl[:, t_idx, :]                                  # (B, n_t, win_p, C_in_p)
        x_spec = pl.BlockSpec((None, None, win_p, C_in_p),
                              lambda b, t: (b, t, 0, 0))
    else:
        x_op = x_cl
        x_spec = pl.BlockSpec((None, x_cl.shape[1], C_in_p),
                              lambda b, t: (b, 0, 0))

    # Fused tap-major weight: w2[k*C_in_p + c, o] = w[o, c, k]; zero pad rows/cols.
    wt = jnp.transpose(w, (2, 1, 0))                              # (K, C_in, C_out)
    wt = jnp.pad(wt, ((0, 0), (0, C_in_p - C_in), (0, C_out_p - C_out)))
    w2 = wt.reshape(K * C_in_p, C_out_p).astype(w_dtype)
    b2 = jnp.pad(bias.astype(jnp.float32), (0, C_out_p - C_out)).reshape(1, C_out_p)

    kernel = functools.partial(
        _tdn_kernel, context=K, dilate=dilate, stride=stride, tl=tl,
        c_in_p=C_in_p, windowed=use_windows, fuse_taps=fuse_taps,
        cast_dtype=(jnp.dtype(compute_dtype) if cast_in_kernel else None))

    cost = pl.CostEstimate(
        flops=2 * B * l_out_p * (K * C_in_p) * C_out_p,
        transcendentals=0,
        bytes_accessed=(int(x_op.size) * x_el + int(w2.size) * w_el
                        + int(b2.size) * 4 + B * l_out_p * C_out_p * out_el))

    out_cl = pl.pallas_call(
        kernel,
        out_shape=jax.ShapeDtypeStruct((B, l_out_p, C_out_p), out_dtype),
        grid=(B, n_t),
        in_specs=[x_spec,
                  pl.BlockSpec((K * C_in_p, C_out_p), lambda b, t: (0, 0)),
                  pl.BlockSpec((1, C_out_p), lambda b, t: (0, 0))],
        out_specs=pl.BlockSpec((None, tl, C_out_p), lambda b, t: (b, t, 0)),
        scratch_shapes=[pltpu.VMEM((tl, C_out_p), jnp.float32)],
        compiler_params=pltpu.CompilerParams(
            dimension_semantics=("parallel", "parallel"),
            vmem_limit_bytes=vmem_limit),
        cost_estimate=cost,
    )(x_op, w2, b2)

    # Trim channel/time padding and return NCL like the PyTorch module.
    return jnp.transpose(out_cl[:, :L_out, :C_out], (0, 2, 1))


def tdn_layer_reference(x, v, g, bias, *, context, stride, dilate, pad):
    """Plain-JAX (f32) reference of the PyTorch forward, for validation."""
    norm = jnp.sqrt(jnp.sum(v * v, axis=(1, 2), keepdims=True))
    w = g * v / norm
    x_p = jnp.pad(x, ((0, 0), (0, 0), (pad[0], pad[1])), mode="edge")
    y = lax.conv_general_dilated(
        x_p, w, window_strides=(stride,), padding="VALID",
        rhs_dilation=(dilate,),
        dimension_numbers=("NCH", "OIH", "NCH"))
    y = y + bias.reshape(1, -1, 1)
    return jnp.clip(y, 0.0, 20.0)


if __name__ == "__main__":
    key = jax.random.PRNGKey(0)

    def make_inputs(k, B, C_in, L, C_out, K):
        kx, kv, kg, kb = jax.random.split(k, 4)
        x = jax.random.normal(kx, (B, C_in, L), dtype=jnp.float32)
        v = jax.random.normal(kv, (C_out, C_in, K), dtype=jnp.float32) * 0.1
        g = jax.random.uniform(kg, (C_out, 1, 1), dtype=jnp.float32,
                               minval=0.5, maxval=1.5)
        bias = jax.random.normal(kb, (C_out,), dtype=jnp.float32) * 0.1
        return x, v, g, bias

    def check(out, ref, atol, rtol, name):
        assert out.shape == ref.shape, (name, out.shape, ref.shape)
        out32 = out.astype(jnp.float32)
        err = float(jnp.max(jnp.abs(out32 - ref)))
        assert jnp.allclose(out32, ref, atol=atol, rtol=rtol), (name, err)

    k1, k2, k3 = jax.random.split(key, 3)

    # Case 1: f32, stride 1, dilation 2 -> single time tile, fused-tap path.
    x, v, g, bias = make_inputs(k1, 2, 16, 24, 32, 3)
    args1 = dict(context=3, stride=1, dilate=2, pad=[2, 2])
    ref1 = tdn_layer_reference(x, v, g, bias, **args1)
    out1 = jax.block_until_ready(tdn_layer_forward(x, v, g, bias, **args1))
    check(out1, ref1, 2e-4, 2e-4, "case1")

    # Case 2: f32, stride 2, context 5, ragged length, several time tiles + trim
    # (exercises the sublane-strided tap loads and the channel padding).
    x2, v2, g2, bias2 = make_inputs(k2, 2, 16, 37, 64, 5)
    args2 = dict(context=5, stride=2, dilate=1, pad=[2, 2])
    ref2 = tdn_layer_reference(x2, v2, g2, bias2, **args2)
    out2 = jax.block_until_ready(
        tdn_layer_forward(x2, v2, g2, bias2, time_tile=16, **args2))
    check(out2, ref2, 2e-4, 2e-4, "case2")

    # Case 3: bf16 MXU inputs (stride 1 -> cast in the wrapper), f32 accumulation.
    out3 = jax.block_until_ready(
        tdn_layer_forward(x, v, g, bias, compute_dtype=jnp.bfloat16, **args1))
    check(out3, ref1, 0.2, 0.05, "case3")

    # Case 4: bf16 MXU inputs with stride 2 -> taps sliced from unpacked f32 and
    # cast inside the kernel (no sublane-strided reads on packed bf16).
    out4 = jax.block_until_ready(
        tdn_layer_forward(x2, v2, g2, bias2, time_tile=16,
                          compute_dtype=jnp.bfloat16, **args2))
    check(out4, ref2, 0.2, 0.05, "case4")

    # Case 5: longer sequence -> per-tap accumulate path (concat would exceed the
    # vreg budget) + forced halo-windowed input tiling (bounded VMEM per step).
    x5, v5, g5, bias5 = make_inputs(k3, 1, 24, 150, 32, 5)
    args5 = dict(context=5, stride=1, dilate=2, pad=[4, 4])
    ref5 = tdn_layer_reference(x5, v5, g5, bias5, **args5)
    out5 = jax.block_until_ready(
        tdn_layer_forward(x5, v5, g5, bias5, time_tile=64, time_windows=True,
                          **args5))
    check(out5, ref5, 2e-4, 2e-4, "case5")

    print("KERNEL_OK")
</pallas_src>

<mosaic_0001>
module attributes {stable_mosaic.version = 11 : i64} {
  func.func @_tdn_kernel(%arg0: i32, %arg1: i32, %arg2: memref<1x32x128xf32, #tpu.memory_space<vmem>>, %arg3: memref<384x128xf32, #tpu.memory_space<vmem>>, %arg4: memref<1x128xf32, #tpu.memory_space<vmem>>, %arg5: memref<1x24x128xf32, #tpu.memory_space<vmem>>, %arg6: memref<24x128xf32, #tpu.memory_space<vmem>>) attributes {dimension_semantics = [#tpu.dimension_semantics<parallel>, #tpu.dimension_semantics<parallel>], iteration_bounds = array<i64: 2, 1>, scalar_prefetch = 0 : i64, scratch_operands = 1 : i64, tpu.core_type = #tpu.core_type<tc>, window_params = [{transform_indices = @transform_0, window_bounds = array<i64: 1, 32, 128>}, {pipeline_mode = #tpu.pipeline_mode<synchronous>, transform_indices = @transform_1, window_bounds = array<i64: 384, 128>}, {pipeline_mode = #tpu.pipeline_mode<synchronous>, transform_indices = @transform_2, window_bounds = array<i64: 1, 128>}, {transform_indices = @transform_3, window_bounds = array<i64: 1, 24, 128>}]} {
    %c24_i32 = arith.constant 24 : i32
    %0 = arith.muli %arg1, %c24_i32 : i32
    %1 = tpu.assume_multiple %0, 24 : i32
    %c0_i32 = arith.constant 0 : i32
    %2 = arith.addi %1, %c0_i32 : i32
    %c0 = arith.constant 0 : index
    %3 = arith.index_cast %2 : i32 to index
    %c0_0 = arith.constant 0 : index
    %4 = vector.load %arg2[%c0, %3, %c0_0] : memref<1x32x128xf32, #tpu.memory_space<vmem>>, vector<1x24x128xf32>
    %5 = vector.shape_cast %4 : vector<1x24x128xf32> to vector<24x128xf32>
    %c2_i32 = arith.constant 2 : i32
    %6 = arith.addi %1, %c2_i32 : i32
    %c0_1 = arith.constant 0 : index
    %7 = arith.index_cast %6 : i32 to index
    %c0_2 = arith.constant 0 : index
    %8 = vector.load %arg2[%c0_1, %7, %c0_2] : memref<1x32x128xf32, #tpu.memory_space<vmem>>, vector<1x24x128xf32>
    %9 = vector.shape_cast %8 : vector<1x24x128xf32> to vector<24x128xf32>
    %c4_i32 = arith.constant 4 : i32
    %10 = arith.addi %1, %c4_i32 : i32
    %c0_3 = arith.constant 0 : index
    %11 = arith.index_cast %10 : i32 to index
    %c0_4 = arith.constant 0 : index
    %12 = vector.load %arg2[%c0_3, %11, %c0_4] : memref<1x32x128xf32, #tpu.memory_space<vmem>>, vector<1x24x128xf32>
    %13 = vector.shape_cast %12 : vector<1x24x128xf32> to vector<24x128xf32>
    %14 = tpu.concatenate %5, %9, %13 in 1 : vector<24x128xf32>, vector<24x128xf32>, vector<24x128xf32> -> vector<24x384xf32>
    %c0_5 = arith.constant 0 : index
    %c0_6 = arith.constant 0 : index
    %15 = vector.load %arg3[%c0_5, %c0_6] : memref<384x128xf32, #tpu.memory_space<vmem>>, vector<384x128xf32>
    %cst = arith.constant dense<0.000000e+00> : vector<24x128xf32>
    %16 = tpu.matmul %14, %15, %cst {dimension_numbers = #tpu.dot_dimension_numbers<[1], [0], [0], [1], [0, 0, 1, 1], [], []>} : vector<24x384xf32>, vector<384x128xf32>, vector<24x128xf32> -> vector<24x128xf32>
    %c0_7 = arith.constant 0 : index
    %c0_8 = arith.constant 0 : index
    %17 = vector.load %arg4[%c0_7, %c0_8] : memref<1x128xf32, #tpu.memory_space<vmem>>, vector<1x128xf32>
    %18 = vector.broadcast %17 : vector<1x128xf32> to vector<24x128xf32>
    %19 = arith.addf %16, %18 : vector<24x128xf32>
    %cst_9 = arith.constant 0.000000e+00 : f32
    %cst_10 = arith.constant 2.000000e+01 : f32
    %20 = vector.broadcast %cst_9 : f32 to vector<24x128xf32>
    %21 = arith.maximumf %20, %19 : vector<24x128xf32>
    %22 = vector.broadcast %cst_10 : f32 to vector<24x128xf32>
    %23 = arith.minimumf %22, %21 : vector<24x128xf32>
    %c0_11 = arith.constant 0 : index
    %c0_12 = arith.constant 0 : index
    %c0_13 = arith.constant 0 : index
    %24 = vector.load %arg5[%c0_11, %c0_12, %c0_13] : memref<1x24x128xf32, #tpu.memory_space<vmem>>, vector<1x24x128xf32>
    %25 = vector.shape_cast %24 : vector<1x24x128xf32> to vector<24x128xf32>
    %26 = vector.shape_cast %23 : vector<24x128xf32> to vector<1x24x128xf32>
    tpu.vector_store %arg5[%c0_11, %c0_12, %c0_13], %26 {strides = array<i32>} : memref<1x24x128xf32, #tpu.memory_space<vmem>>, vector<1x24x128xf32>,
    return
  }
  func.func @transform_0(%arg0: i32, %arg1: i32) -> (i32, i32, i32) {
    %c0_i32 = arith.constant 0 : i32
    %c0_i32_0 = arith.constant 0 : i32
    %c0_i32_1 = arith.constant 0 : i32
    return %arg0, %c0_i32, %c0_i32_0 : i32, i32, i32
  }
  func.func @transform_1(%arg0: i32, %arg1: i32) -> (i32, i32) {
    %c0_i32 = arith.constant 0 : i32
    %c0_i32_0 = arith.constant 0 : i32
    %c0_i32_1 = arith.constant 0 : i32
    return %c0_i32, %c0_i32_0 : i32, i32
  }
  func.func @transform_2(%arg0: i32, %arg1: i32) -> (i32, i32) {
    %c0_i32 = arith.constant 0 : i32
    %c0_i32_0 = arith.constant 0 : i32
    %c0_i32_1 = arith.constant 0 : i32
    return %c0_i32, %c0_i32_0 : i32, i32
  }
  func.func @transform_3(%arg0: i32, %arg1: i32) -> (i32, i32, i32) {
    %c0_i32 = arith.constant 0 : i32
    %c0_i32_0 = arith.constant 0 : i32
    return %arg0, %arg1, %c0_i32 : i32, i32, i32
  }
}

</mosaic_0001>

<llo_original>
// kernel: tpu_custom_call.1
$region0: #{tpu_custom_call.1}
  #allocation0 [shape = 'u32[]', space=smem, size = 0x4, offset = 0x4, fixed_abs, tag = 'smem constant byte address 0x4 - core index']
  #allocation1 [shape = 'u32[144,128]{1,0:T(1,128)}', space=vmem, size = 0x12000, scoped, tag = 'internal scratch']
  #allocation2 [shape = 'f32[24,128]{1,0:T(8,128)}', space=vmem, size = 0x3000, scoped, tag = 'scratch operand']
  %s0 = inlined_call_operand.hbm [shape: f32[2,32,128], index: 0, kind: input, shape index: {}]
  %s1 = inlined_call_operand.hbm [shape: f32[384,128], index: 1, kind: input, shape index: {}]
  %s2 = inlined_call_operand.vmem [shape: f32[1,128], index: 2, kind: input, shape index: {}]
  %s3 = inlined_call_operand.hbm [shape: f32[2,24,128], index: 3, kind: output, shape index: {}]
  %s4 = sld [smem:[#allocation0]]
  $region53: #{tpu_custom_call.1} parent=0
    _
  %s6 = ssub.s32 1, %s4
  %s7 = scalar_select 0, %s6, %s4
  $region1: #{tpu_custom_call.1} parent=0
    #allocation3 [shape = 'u8[32768]{0}', space=vmem, size = 0x8000, scoped, tag = 'input window, operand 0']
    #allocation4 [shape = 's32[2]{0}', space=sflag, size = 0x8, scoped, tag = 'scoped memory for tpu_custom_call.1']
    #allocation5 [shape = 's32[2]{0}', space=sflag, size = 0x8, scoped, tag = 'scoped memory for tpu_custom_call.1']
    #allocation6 [shape = 'u8[196608]{0}', space=vmem, size = 0x30000, scoped, tag = 'input window, operand 1, single buffered']
    #allocation7 [shape = 's32[1]{0}', space=sflag, size = 0x4, scoped, tag = 'scoped memory for tpu_custom_call.1']
    #allocation8 [shape = 'u8[24576]{0}', space=vmem, size = 0x6000, scoped, tag = 'output window, operand 0']
    %8 = vsyncpa [#allocation4], 0
    %s9 = scalar_lea.sflag [#allocation4], 1
    %10 = vsyncpa %s9, 0
    %11 = vsyncpa [#allocation7], 0
    %12 = vsyncpa [#allocation5], 0
    %s13 = scalar_lea.sflag [#allocation5], 1
    %14 = vsyncpa %s13, 0
    loop: start=0, step=1, limit=4
    $region2: #{tpu_custom_call.1} parent=1 // loop_pre_header
      _
    $region3: #{tpu_custom_call.1} parent=1 // loop_header
      %s16 = sphi 0, %s20
      %p17 = scmp.ge.s32.totalorder %s16, 4
      %s23 = sphi 0, %s35
      %s24 = sphi 0, %s31
      %s25 = sphi 0, %s23
      %s26 = sphi 0, %s24
      %s27 = sphi 0, %s25
      %s28 = sphi 0, %s26
      %s38 = sphi 0, %s40
      %s41 = sphi 0, %s38
      %s42 = sphi 0, %s41
      %s58 = sphi 0, %s42
      %s62 = sphi 0, %s62
      %s64 = sphi 0, %s62
      %s65 = sphi 0, %s64
      %s79 = sphi 0, %s65
      %s83 = sphi 0, %s83
      %s85 = sphi 0, %s83
      %s86 = sphi 0, %s85
      %s100 = sphi 0, %s86
      %s108 = sphi 0, %s110
      %s111 = sphi 0, %s108
      %s112 = sphi 0, %s111
      %s128 = sphi 0, %s112
    $region4: #{tpu_custom_call.1} parent=1 // loop_header_branch
      %19 = sbr.rel (%p17) target = $region8
    $region5: #{tpu_custom_call.1} parent=1 // loop_body
      %s21 = ssub.s32 %s16, 1
      %s22 = ssub.s32 %s16, 2
      %s29 = sadd.s32 1, %s24
      %p30 = scmp.ge.s32.totalorder %s29, 1
      %s31 = scalar_select %p30, 0, %s29
      %s32 = sadd.s32 1, %s23
      %s33 = scalar_select %p30, %s32, %s23
      %p34 = scmp.ge.s32.totalorder %s33, 2
      %s35 = scalar_select %p34, 0, %s33
      %s36 = ssub.s32 %s23, %s35
      %p37 = scmp.eq.s32.totalorder %s36, 0
      %s39 = sadd.s32 %s38, 1
      %s40 = scalar_select %p37, %s38, %s39
      %p43 = pneg %p37
      %p44 = scmp.eq.s32.totalorder %s16, 1
      %p45 = por %p43, %p44
      %p46 = scmp.ne.s32.totalorder %s38, %s41
      %p47 = scmp.eq.s32.totalorder %s16, 0
      %p48 = por %p46, %p47
      %p49 = scmp.ne.s32.totalorder %s38, %s41
      %p50 = scmp.eq.s32.totalorder %s21, 1
      %p51 = por %p49, %p50
      %p52 = scmp.ne.s32.totalorder %s41, %s42
      %p53 = scmp.eq.s32.totalorder %s21, 0
      %p54 = por %p52, %p53
      %p55 = scmp.ne.s32.totalorder %s41, %s42
      %p56 = scmp.eq.s32.totalorder %s22, 1
      %p57 = por %p55, %p56
      %p59 = scmp.ne.s32.totalorder %s42, %s58
      %p60 = scmp.eq.s32.totalorder %s22, 0
      %p61 = por %p59, %p60
      %s63 = sadd.s32 %s62, 1
      %p66 = scmp.eq.s32.totalorder %s16, 1
      %p67 = scmp.ne.s32.totalorder %s62, %s64
      %p68 = scmp.eq.s32.totalorder %s16, 0
      %p69 = por %p67, %p68
      %p70 = scmp.ne.s32.totalorder %s62, %s64
      %p71 = scmp.eq.s32.totalorder %s21, 1
      %p72 = por %p70, %p71
      %p73 = scmp.ne.s32.totalorder %s64, %s65
      %p74 = scmp.eq.s32.totalorder %s21, 0
      %p75 = por %p73, %p74
      %p76 = scmp.ne.s32.totalorder %s64, %s65
      %p77 = scmp.eq.s32.totalorder %s22, 1
      %p78 = por %p76, %p77
      %p80 = scmp.ne.s32.totalorder %s65, %s79
      %p81 = scmp.eq.s32.totalorder %s22, 0
      %p82 = por %p80, %p81
      %s84 = sadd.s32 %s83, 1
      %p87 = scmp.eq.s32.totalorder %s16, 1
      %p88 = scmp.ne.s32.totalorder %s83, %s85
      %p89 = scmp.eq.s32.totalorder %s16, 0
      %p90 = por %p88, %p89
      %p91 = scmp.ne.s32.totalorder %s83, %s85
      %p92 = scmp.eq.s32.totalorder %s21, 1
      %p93 = por %p91, %p92
      %p94 = scmp.ne.s32.totalorder %s85, %s86
      %p95 = scmp.eq.s32.totalorder %s21, 0
      %p96 = por %p94, %p95
      %p97 = scmp.ne.s32.totalorder %s85, %s86
      %p98 = scmp.eq.s32.totalorder %s22, 1
      %p99 = por %p97, %p98
      %p101 = scmp.ne.s32.totalorder %s86, %s100
      %p102 = scmp.eq.s32.totalorder %s22, 0
      %p103 = por %p101, %p102
      %s104 = ssub.s32 %s23, %s35
      %s105 = ssub.s32 %s24, %s31
      %s106 = sor.u32 %s104, %s105
      %p107 = scmp.eq.s32.totalorder %s106, 0
      %s109 = sadd.s32 %s108, 1
      %s110 = scalar_select %p107, %s108, %s109
      %p113 = pneg %p107
      %p114 = scmp.eq.s32.totalorder %s16, 1
      %p115 = por %p113, %p114
      %p116 = scmp.ne.s32.totalorder %s108, %s111
      %p117 = scmp.eq.s32.totalorder %s16, 0
      %p118 = por %p116, %p117
      %p119 = scmp.ne.s32.totalorder %s108, %s111
      %p120 = scmp.eq.s32.totalorder %s21, 1
      %p121 = por %p119, %p120
      %p122 = scmp.ne.s32.totalorder %s111, %s112
      %p123 = scmp.eq.s32.totalorder %s21, 0
      %p124 = por %p122, %p123
      %p125 = scmp.ne.s32.totalorder %s111, %s112
      %p126 = scmp.eq.s32.totalorder %s22, 1
      %p127 = por %p125, %p126
      %p129 = scmp.ne.s32.totalorder %s112, %s128
      %p130 = scmp.eq.s32.totalorder %s22, 0
      %p131 = por %p129, %p130
      %p132 = scmp.le.s32.totalorder 1, %s16
      %p133 = scmp.lt.s32.totalorder %s16, 3
      %p134 = pnand %p132, %p133
      %p135 = pneg %p134
      // Predicated region
      $region9: #{tpu_custom_call.1} parent=5 // pred_check
        _
      $region10: #{tpu_custom_call.1} parent=5 // pred_check_branch
        %137 = sbr.rel (%p134) target = $region12
      $region11: #{tpu_custom_call.1} parent=5 // pred_region
        %s138 = ssub.s32 %s16, 1
        // Predicated region
        $region13: #{tpu_custom_call.1} parent=11 // pred_check
          %p139 = pneg %p75
        $region14: #{tpu_custom_call.1} parent=11 // pred_check_branch
          %141 = sbr.rel (%p139) target = $region16
        $region15: #{tpu_custom_call.1} parent=11 // pred_region
          %s143 = ssub.s32 6144, 6144
          %144 = vsyncadd [#allocation7], %s143
          %s145 = sshll.u32 [#allocation6], 4
          %s146 = int_to_ptr.vmem [resolvable:$true] %s145
          %151 = dma.hbm_to_vmem [thread:$0]  %s1, 6144, %s146, [#allocation7], 128, 128, 8
        $region16: #{tpu_custom_call.1} parent=11 // pred_fallthru
          _
        // Predicated region
        $region17: #{tpu_custom_call.1} parent=11 // pred_check
          %p152 = pneg %p96
        $region18: #{tpu_custom_call.1} parent=11 // pred_check_branch
          %154 = sbr.rel (%p152) target = $region20
        $region19: #{tpu_custom_call.1} parent=11 // pred_region
          _
        $region20: #{tpu_custom_call.1} parent=11 // pred_fallthru
          _
      $region12: #{tpu_custom_call.1} parent=5 // pred_fallthru
        _
      %p155 = scmp.lt.s32.totalorder %s16, 2
      // Predicated region
      $region21: #{tpu_custom_call.1} parent=5 // pred_check
        %p156 = pneg %p155
      $region22: #{tpu_custom_call.1} parent=5 // pred_check_branch
        %158 = sbr.rel (%p156) target = $region24
      $region23: #{tpu_custom_call.1} parent=5 // pred_region
        // Predicated region
        $region25: #{tpu_custom_call.1} parent=23 // pred_check
          %p159 = pneg %p48
        $region26: #{tpu_custom_call.1} parent=23 // pred_check_branch
          %161 = sbr.rel (%p159) target = $region28
        $region27: #{tpu_custom_call.1} parent=23 // pred_region
          %s162 = sand.u32 %s38, 1
          %s163 = scalar_lea.sflag [#allocation4], %s162
          %s164 = sand.u32 %s38, 1
          %s165 = smul.addr %s164, 32
          %s166 = scalar_lea.vmem [#allocation3], %s165
          %s168 = ssub.s32 512, 512
          %169 = vsyncadd %s163, %s168
          %s170 = smul.addr %s23, 4
          %s171 = smul.addr %s170, 128
          %s172 = scalar_lea.hbm %s0, %s171
          %s173 = sshll.u32 %s166, 4
          %s174 = int_to_ptr.vmem [resolvable:$true] %s173
          %179 = dma.hbm_to_vmem [thread:$0]  %s172, 512, %s174, %s163, 128, 128, 8
        $region28: #{tpu_custom_call.1} parent=23 // pred_fallthru
          _
      $region24: #{tpu_custom_call.1} parent=5 // pred_fallthru
        _
      %p180 = scmp.le.s32.totalorder 1, %s16
      %p181 = scmp.lt.s32.totalorder %s16, 3
      %p182 = pnand %p180, %p181
      %p183 = pneg %p182
      // Predicated region
      $region29: #{tpu_custom_call.1} parent=5 // pred_check
        _
      $region30: #{tpu_custom_call.1} parent=5 // pred_check_branch
        %185 = sbr.rel (%p182) target = $region32
      $region31: #{tpu_custom_call.1} parent=5 // pred_region
        %s186 = ssub.s32 %s16, 1
        %s187 = sand.u32 %s41, 1
        %s188 = scalar_lea.sflag [#allocation4], %s187
        %s189 = sand.u32 %s41, 1
        %s190 = smul.addr %s189, 32
        %s191 = scalar_lea.vmem [#allocation3], %s190
        // Predicated region
        $region33: #{tpu_custom_call.1} parent=31 // pred_check
          %p192 = pneg %p54
        $region34: #{tpu_custom_call.1} parent=31 // pred_check_branch
          %194 = sbr.rel (%p192) target = $region36
        $region35: #{tpu_custom_call.1} parent=31 // pred_region
          %195 = dma.done %s188, 512
        $region36: #{tpu_custom_call.1} parent=31 // pred_fallthru
          _
        // Predicated region
        $region37: #{tpu_custom_call.1} parent=31 // pred_check
          %p196 = pneg %p75
        $region38: #{tpu_custom_call.1} parent=31 // pred_check_branch
          %198 = sbr.rel (%p196) target = $region40
        $region39: #{tpu_custom_call.1} parent=31 // pred_region
          %199 = dma.done [#allocation7], 6144
        $region40: #{tpu_custom_call.1} parent=31 // pred_fallthru
          _
        %s200 = sand.u32 %s41, 1
        %s201 = scalar_lea.sflag [#allocation4], %s200
        %s202 = sand.u32 %s41, 1
        %s203 = smul.addr %s202, 32
        %s204 = scalar_lea.vmem [#allocation3], %s203
        %p205 = pneg %p54
        %p206 = pneg %p51
        %p207 = pneg %p75
        %p208 = pneg %p72
        %p209 = pneg %p96
        %p210 = pneg %p93
        %p211 = pneg %p124
        %p212 = pneg %p121
        %s213 = sand.u32 %s111, 1
        %s214 = scalar_lea.sflag [#allocation5], %s213
        %s215 = sand.u32 %s111, 1
        %s216 = smul.addr %s215, 24
        %s217 = scalar_lea.vmem [#allocation8], %s216
        %s218 = smul.u32 3, %s26
        %s219 = smul.u32 %s26, 24
        %s220 = scalar_lea.vmem %s191, %s219 [#allocation3]
        %v221 = vld [vmem:[%s220] sm:$0xff]
        %v222 = vld [vmem:[%s220 + $0x8] sm:$0xff]
        %v223 = vld [vmem:[%s220 + $0x10] sm:$0xff]
        %s224 = sadd.s32 %s219, 2
        %s225 = scalar_lea.vmem %s191, %s224 [#allocation3]
        %v226 = vld [vmem:[%s225] sm:$0xff]
        %v227 = vld [vmem:[%s225 + $0x8] sm:$0xff]
        %v228 = vld [vmem:[%s225 + $0x10] sm:$0xff]
        %s229 = sadd.s32 %s219, 4
        %s230 = scalar_lea.vmem %s191, %s229 [#allocation3]
        %v231 = vld [vmem:[%s230] sm:$0xff]
        %v232 = vld [vmem:[%s230 + $0x8] sm:$0xff]
        %v233 = vld [vmem:[%s230 + $0x10] sm:$0xff]
        %v234 = vld [vmem:[#allocation6] sm:$0xff]
        %v235 = vld [vmem:[#allocation6 + $0x8] sm:$0xff]
        %v236 = vld [vmem:[#allocation6 + $0x10] sm:$0xff]
        %v237 = vld [vmem:[#allocation6 + $0x18] sm:$0xff]
        %v238 = vld [vmem:[#allocation6 + $0x20] sm:$0xff]
        %v239 = vld [vmem:[#allocation6 + $0x28] sm:$0xff]
        %v240 = vld [vmem:[#allocation6 + $0x30] sm:$0xff]
        %v241 = vld [vmem:[#allocation6 + $0x38] sm:$0xff]
        %v242 = vld [vmem:[#allocation6 + $0x40] sm:$0xff]
        %v243 = vld [vmem:[#allocation6 + $0x48] sm:$0xff]
        %v244 = vld [vmem:[#allocation6 + $0x50] sm:$0xff]
        %v245 = vld [vmem:[#allocation6 + $0x58] sm:$0xff]
        %v246 = vld [vmem:[#allocation6 + $0x60] sm:$0xff]
        %v247 = vld [vmem:[#allocation6 + $0x68] sm:$0xff]
        %v248 = vld [vmem:[#allocation6 + $0x70] sm:$0xff]
        %v249 = vld [vmem:[#allocation6 + $0x78] sm:$0xff]
        %v250 = vld [vmem:[#allocation6 + $0x80] sm:$0xff]
        %v251 = vld [vmem:[#allocation6 + $0x88] sm:$0xff]
        %v252 = vld [vmem:[#allocation6 + $0x90] sm:$0xff]
        %v253 = vld [vmem:[#allocation6 + $0x98] sm:$0xff]
        %v254 = vld [vmem:[#allocation6 + $0xa0] sm:$0xff]
        %v255 = vld [vmem:[#allocation6 + $0xa8] sm:$0xff]
        %v256 = vld [vmem:[#allocation6 + $0xb0] sm:$0xff]
        %v257 = vld [vmem:[#allocation6 + $0xb8] sm:$0xff]
        %v258 = vld [vmem:[#allocation6 + $0xc0] sm:$0xff]
        %v259 = vld [vmem:[#allocation6 + $0xc8] sm:$0xff]
        %v260 = vld [vmem:[#allocation6 + $0xd0] sm:$0xff]
        %v261 = vld [vmem:[#allocation6 + $0xd8] sm:$0xff]
        %v262 = vld [vmem:[#allocation6 + $0xe0] sm:$0xff]
        %v263 = vld [vmem:[#allocation6 + $0xe8] sm:$0xff]
        %v264 = vld [vmem:[#allocation6 + $0xf0] sm:$0xff]
        %v265 = vld [vmem:[#allocation6 + $0xf8] sm:$0xff]
        %v266 = vld [vmem:[#allocation6 + $0x100] sm:$0xff]
        %v267 = vld [vmem:[#allocation6 + $0x108] sm:$0xff]
        %v268 = vld [vmem:[#allocation6 + $0x110] sm:$0xff]
        %v269 = vld [vmem:[#allocation6 + $0x118] sm:$0xff]
        %v270 = vld [vmem:[#allocation6 + $0x120] sm:$0xff]
        %v271 = vld [vmem:[#allocation6 + $0x128] sm:$0xff]
        %v272 = vld [vmem:[#allocation6 + $0x130] sm:$0xff]
        %v273 = vld [vmem:[#allocation6 + $0x138] sm:$0xff]
        %v274 = vld [vmem:[#allocation6 + $0x140] sm:$0xff]
        %v275 = vld [vmem:[#allocation6 + $0x148] sm:$0xff]
        %v276 = vld [vmem:[#allocation6 + $0x150] sm:$0xff]
        %v277 = vld [vmem:[#allocation6 + $0x158] sm:$0xff]
        %v278 = vld [vmem:[#allocation6 + $0x160] sm:$0xff]
        %v279 = vld [vmem:[#allocation6 + $0x168] sm:$0xff]
        %v280 = vld [vmem:[#allocation6 + $0x170] sm:$0xff]
        %v281 = vld [vmem:[#allocation6 + $0x178] sm:$0xff]
        %v282 = vld [vmem:[%s2] sm:$0x1]
        %v284 = vlaneseq
        %v285 = vshrl.u32 %v284, 7
        %v286 = vsub.s32 0, %v285
        %v287 = vrot.slane %v282, %v286
        %289 = vmatprep.subr.mxu0 0.0
        %290 = vmatpush1.msra.mxu0 %v234
        %291 = vmatprep.subr.mxu0 0.0
        %292 = vmatpush1.msra.mxu0 %v235
        %293 = vmatprep.subr.mxu0 0.0
        %294 = vmatpush1.msra.mxu0 %v236
        %295 = vmatprep.subr.mxu0 0.0
        %296 = vmatpush1.msra.mxu0 %v237
        %297 = vmatprep.subr.mxu0 0.0
        %298 = vmatpush1.msra.mxu0 %v238
        %299 = vmatprep.subr.mxu0 0.0
        %300 = vmatpush1.msra.mxu0 %v239
        %301 = vmatprep.subr.mxu0 0.0
        %302 = vmatpush1.msra.mxu0 %v240
        %303 = vmatprep.subr.mxu0 0.0
        %304 = vmatpush1.msra.mxu0 %v241
        %305 = vmatprep.subr.mxu0 0.0
        %306 = vmatpush1.msra.mxu0 %v242
        %307 = vmatprep.subr.mxu0 0.0
        %308 = vmatpush1.msra.mxu0 %v243
        %309 = vmatprep.subr.mxu0 0.0
        %310 = vmatpush1.msra.mxu0 %v244
        %311 = vmatprep.subr.mxu0 0.0
        %312 = vmatpush1.msra.mxu0 %v245
        %313 = vmatprep.subr.mxu0 0.0
        %314 = vmatpush1.msra.mxu0 %v246
        %315 = vmatprep.subr.mxu0 0.0
        %316 = vmatpush1.msra.mxu0 %v247
        %317 = vmatprep.subr.mxu0 0.0
        %318 = vmatpush1.msra.mxu0 %v248
        %319 = vmatprep.subr.mxu0 0.0
        %320 = vmatpush1.msra.mxu0 %v249
        %321 = vmatprep.subr.mxu0 0.0
        %322 = vmatpush1.msra.mxu0 %v250
        %323 = vmatprep.subr.mxu0 0.0
        %324 = vmatpush1.msra.mxu0 %v251
        %325 = vmatprep.subr.mxu0 0.0
        %326 = vmatpush1.msra.mxu0 %v252
        %327 = vmatprep.subr.mxu0 0.0
        %328 = vmatpush1.msra.mxu0 %v253
        %329 = vmatprep.subr.mxu0 0.0
        %330 = vmatpush1.msra.mxu0 %v254
        %331 = vmatprep.subr.mxu0 0.0
        %332 = vmatpush1.msra.mxu0 %v255
        %333 = vmatprep.subr.mxu0 0.0
        %334 = vmatpush1.msra.mxu0 %v256
        %335 = vmatprep.subr.mxu0 0.0
        %336 = vmatpush1.msra.mxu0 %v257
        %337 = vmatprep.subr.mxu0 0.0
        %338 = vmatpush1.msra.mxu0 %v258
        %339 = vmatprep.subr.mxu0 0.0
        %340 = vmatpush1.msra.mxu0 %v259
        %341 = vmatprep.subr.mxu0 0.0
        %342 = vmatpush1.msra.mxu0 %v260
        %343 = vmatprep.subr.mxu0 0.0
        %344 = vmatpush1.msra.mxu0 %v261
        %345 = vmatprep.subr.mxu0 0.0
        %346 = vmatpush1.msra.mxu0 %v262
        %347 = vmatprep.subr.mxu0 0.0
        %348 = vmatpush1.msra.mxu0 %v263
        %349 = vmatprep.subr.mxu0 0.0
        %350 = vmatpush1.msra.mxu0 %v264
        %351 = vmatprep.subr.mxu0 0.0
        %352 = vmatpush1.msra.mxu0 %v265
        %353 = vmatprep.mubr.f32.mxu0 %v226
        %354 = vmatmul.mubr.f32.gmra.mrb[0].mxu0 %v221
        %v355 = vpop.f32.mrb[0].mxu0
        %v356 = vadd.f32 %v287, %v355
        %v357 = vpop.f32.mrb[0].mxu0
        %358 = vmatprep.mubr.f32.mxu0 %v227
        %359 = vmatmul.mubr.f32.gmra.mrb[0].mxu0 %v222
        %v360 = vpop.f32.mrb[0].mxu0
        %v361 = vadd.f32 %v287, %v360
        %v362 = vpop.f32.mrb[0].mxu0
        %363 = vmatprep.mubr.f32.mxu0 %v228
        %364 = vmatmul.mubr.f32.gmra.mrb[0].mxu0 %v223
        %v365 = vpop.f32.mrb[0].mxu0
        %v366 = vadd.f32 %v287, %v365
        %v367 = vpop.f32.mrb[0].mxu0
        %368 = vdwg.mxu0
        %369 = vmatprep.subr.mxu0 0.0
        %370 = vmatpush1.msra.mxu0 %v266
        %371 = vmatprep.subr.mxu0 0.0
        %372 = vmatpush1.msra.mxu0 %v267
        %373 = vmatprep.subr.mxu0 0.0
        %374 = vmatpush1.msra.mxu0 %v268
        %375 = vmatprep.subr.mxu0 0.0
        %376 = vmatpush1.msra.mxu0 %v269
        %377 = vmatprep.subr.mxu0 0.0
        %378 = vmatpush1.msra.mxu0 %v270
        %379 = vmatprep.subr.mxu0 0.0
        %380 = vmatpush1.msra.mxu0 %v271
        %381 = vmatprep.subr.mxu0 0.0
        %382 = vmatpush1.msra.mxu0 %v272
        %383 = vmatprep.subr.mxu0 0.0
        %384 = vmatpush1.msra.mxu0 %v273
        %385 = vmatprep.subr.mxu0 0.0
        %386 = vmatpush1.msra.mxu0 %v274
        %387 = vmatprep.subr.mxu0 0.0
        %388 = vmatpush1.msra.mxu0 %v275
        %389 = vmatprep.subr.mxu0 0.0
        %390 = vmatpush1.msra.mxu0 %v276
        %391 = vmatprep.subr.mxu0 0.0
        %392 = vmatpush1.msra.mxu0 %v277
        %393 = vmatprep.subr.mxu0 0.0
        %394 = vmatpush1.msra.mxu0 %v278
        %395 = vmatprep.subr.mxu0 0.0
        %396 = vmatpush1.msra.mxu0 %v279
        %397 = vmatprep.subr.mxu0 0.0
        %398 = vmatpush1.msra.mxu0 %v280
        %399 = vmatprep.subr.mxu0 0.0
        %400 = vmatpush1.msra.mxu0 %v281
        %401 = vmatprep.subr.mxu0 0.0
        %402 = vmatpush1.msra.mxu0 0.0
        %403 = vmatprep.subr.mxu0 0.0
        %404 = vmatpush1.msra.mxu0 0.0
        %405 = vmatprep.subr.mxu0 0.0
        %406 = vmatpush1.msra.mxu0 0.0
        %407 = vmatprep.subr.mxu0 0.0
        %408 = vmatpush1.msra.mxu0 0.0
        %409 = vmatprep.subr.mxu0 0.0
        %410 = vmatpush1.msra.mxu0 0.0
        %411 = vmatprep.subr.mxu0 0.0
        %412 = vmatpush1.msra.mxu0 0.0
        %413 = vmatprep.subr.mxu0 0.0
        %414 = vmatpush1.msra.mxu0 0.0
        %415 = vmatprep.subr.mxu0 0.0
        %416 = vmatpush1.msra.mxu0 0.0
        %417 = vmatprep.subr.mxu0 0.0
        %418 = vmatpush1.msra.mxu0 0.0
        %419 = vmatprep.subr.mxu0 0.0
        %420 = vmatpush1.msra.mxu0 0.0
        %421 = vmatprep.subr.mxu0 0.0
        %422 = vmatpush1.msra.mxu0 0.0
        %423 = vmatprep.subr.mxu0 0.0
        %424 = vmatpush1.msra.mxu0 0.0
        %425 = vmatprep.subr.mxu0 0.0
        %426 = vmatpush1.msra.mxu0 0.0
        %427 = vmatprep.subr.mxu0 0.0
        %428 = vmatpush1.msra.mxu0 0.0
        %429 = vmatprep.subr.mxu0 0.0
        %430 = vmatpush1.msra.mxu0 0.0
        %431 = vmatprep.subr.mxu0 0.0
        %432 = vmatpush1.msra.mxu0 0.0
        %433 = vmatprep.mubr.f32.mxu0 0.0
        %434 = vmatmul.mubr.f32.gmra.mrb[0].mxu0 %v231
        %v435 = vpop.f32.mrb[0].mxu0
        %v436 = vadd.f32 %v356, %v435
        %v437 = vpop.f32.mrb[0].mxu0
        %438 = vmatprep.mubr.f32.mxu0 0.0
        %439 = vmatmul.mubr.f32.gmra.mrb[0].mxu0 %v232
        %v440 = vpop.f32.mrb[0].mxu0
        %v441 = vadd.f32 %v361, %v440
        %v442 = vpop.f32.mrb[0].mxu0
        %443 = vmatprep.mubr.f32.mxu0 0.0
        %444 = vmatmul.mubr.f32.gmra.mrb[0].mxu0 %v233
        %v445 = vpop.f32.mrb[0].mxu0
        %v446 = vadd.f32 %v366, %v445
        %v447 = vpop.f32.mrb[0].mxu0
        %448 = vdwg.mxu0
        %v449 = vmax.f32 %v436, 0.0
        %v450 = vmax.f32 %v441, 0.0
        %v451 = vmax.f32 %v446, 0.0
        %v452 = vmin.f32 %v449, 20.0
        %v453 = vmin.f32 %v450, 20.0
        %v454 = vmin.f32 %v451, 20.0
        %455 = vst [vmem:[%s217] sm:$0xff] %v452
        %456 = vst [vmem:[%s217 + $0x8] sm:$0xff] %v453
        %457 = vst [vmem:[%s217 + $0x10] sm:$0xff] %v454
        %s458 = sand.u32 %s111, 1
        %s459 = scalar_lea.sflag [#allocation5], %s458
        %s460 = sand.u32 %s111, 1
        %s461 = smul.addr %s460, 24
        %s462 = scalar_lea.vmem [#allocation8], %s461
        // Predicated region
        $region41: #{tpu_custom_call.1} parent=31 // pred_check
          %p463 = pneg %p121
        $region42: #{tpu_custom_call.1} parent=31 // pred_check_branch
          %465 = sbr.rel (%p463) target = $region44
        $region43: #{tpu_custom_call.1} parent=31 // pred_region
          %s466 = smul.u32 3, %s26
          %s468 = ssub.s32 384, 384
          %469 = vsyncadd %s459, %s468
          %s470 = smul.addr %s25, 3
          %s471 = sadd.s32 %s466, %s470
          %s472 = smul.addr %s471, 128
          %s473 = scalar_lea.hbm %s3, %s472
          %s474 = sshll.u32 %s462, 4
          %s475 = int_to_ptr.vmem [resolvable:$true] %s474
          %480 = dma.vmem_to_hbm [thread:$0]  %s475, 384, %s473, %s459, 128, 128, 8
        $region44: #{tpu_custom_call.1} parent=31 // pred_fallthru
          _
      $region32: #{tpu_custom_call.1} parent=5 // pred_fallthru
        _
      %p481 = scmp.le.s32.totalorder 2, %s16
      // Predicated region
      $region45: #{tpu_custom_call.1} parent=5 // pred_check
        %p482 = pneg %p481
      $region46: #{tpu_custom_call.1} parent=5 // pred_check_branch
        %484 = sbr.rel (%p482) target = $region48
      $region47: #{tpu_custom_call.1} parent=5 // pred_region
        %s485 = ssub.s32 %s16, 2
        // Predicated region
        $region49: #{tpu_custom_call.1} parent=47 // pred_check
          %p486 = pneg %p127
        $region50: #{tpu_custom_call.1} parent=47 // pred_check_branch
          %488 = sbr.rel (%p486) target = $region52
        $region51: #{tpu_custom_call.1} parent=47 // pred_region
          %s489 = sand.u32 %s112, 1
          %s490 = scalar_lea.sflag [#allocation5], %s489
          %s491 = sand.u32 %s112, 1
          %s492 = smul.addr %s491, 24
          %s493 = scalar_lea.vmem [#allocation8], %s492
          %494 = dma.done %s490, 384
        $region52: #{tpu_custom_call.1} parent=47 // pred_fallthru
          _
      $region48: #{tpu_custom_call.1} parent=5 // pred_fallthru
        _
    $region6: #{tpu_custom_call.1} parent=1 // loop_footer
      %s20 = sadd.s32 1, %s16
    $region7: #{tpu_custom_call.1} parent=1 // loop_footer_branch
      %15 = sbr.rel target = $region3
    $region8: #{tpu_custom_call.1} parent=1 // loop_exit
      _
    %495 = vsyncpa [#allocation4], 1
    %s496 = scalar_lea.sflag [#allocation4], 1
    %497 = vsyncpa %s496, 1
    %498 = vsyncpa [#allocation7], 1
    %499 = vsyncpa [#allocation5], 1
    %s500 = scalar_lea.sflag [#allocation5], 1
    %501 = vsyncpa %s500, 1

</llo_original>
